<compile_context>
chip_gen: v7x
topology: tpu7x:2x2x1
jax: 0.10.0
libtpu: 0.0.40
codegen_flags: <defaults>
</compile_context>

<pallas_src>
import math

import jax
import jax.numpy as jnp
from jax.experimental import pallas as pl
from jax.experimental.pallas import tpu as pltpu


def _pos_encoding_gather_kernel(ids_ref, table_ref, out_ref, onehot_ref):
    # ids_ref:    [Tm, 1]  int32   (tile of flattened position ids)
    # table_ref:  [V, E]   float32 (full PE table, VMEM-resident, not pipelined)
    # out_ref:    [Tm, E]  float32
    # onehot_ref: [Tm, V]  float32 VMEM scratch
    ids = ids_ref[...]                                            # [Tm, 1]
    tm = ids.shape[0]
    v = table_ref.shape[0]

    lane_iota = jax.lax.broadcasted_iota(jnp.int32, (tm, v), 1)   # [Tm, V]
    onehot_ref[...] = jnp.where(lane_iota == ids, 1.0, 0.0)       # single select

    # Row gather as an MXU matmul: exactly one 1.0 per row.
    out_ref[...] = jnp.dot(onehot_ref[...], table_ref[...],
                           preferred_element_type=jnp.float32)


def positional_encoding_lookup(position_ids, pe_table, *, tile_m=256):
    """position_ids: int array [...], pe_table: [max_len, d_model] f32 -> [..., d_model]."""
    lead_shape = position_ids.shape
    v, e = pe_table.shape
    n = math.prod(lead_shape)

    # Pad N up to a multiple of tile_m (pad id 0 is a valid row; rows are
    # sliced off below), instead of asserting divisibility.
    n_pad = ((n + tile_m - 1) // tile_m) * tile_m
    ids_flat = position_ids.reshape(n).astype(jnp.int32)
    if n_pad != n:
        ids_flat = jnp.pad(ids_flat, (0, n_pad - n))
    ids_2d = ids_flat.reshape(n_pad, 1)

    # Raise the scoped-VMEM limit only when the resident table + scratch need it.
    vmem_needed = (v * e * 4) + (tile_m * v * 4) + 4 * tile_m * (e + 1) * 4 + (1 << 20)
    compiler_kwargs = dict(dimension_semantics=("parallel",))
    if vmem_needed > (16 << 20):
        compiler_kwargs["vmem_limit_bytes"] = vmem_needed

    out_flat = pl.pallas_call(
        _pos_encoding_gather_kernel,
        out_shape=jax.ShapeDtypeStruct((n_pad, e), jnp.float32),
        grid_spec=pltpu.PrefetchScalarGridSpec(
            num_scalar_prefetch=0,
            grid=(n_pad // tile_m,),
            in_specs=[
                pl.BlockSpec((tile_m, 1), lambda i: (i, 0)),           # ids tile
                pl.BlockSpec(memory_space=pltpu.MemorySpace.VMEM),     # whole table, single copy
            ],
            out_specs=pl.BlockSpec((tile_m, e), lambda i: (i, 0)),     # lane-dense output tile
            scratch_shapes=[pltpu.VMEM((tile_m, v), jnp.float32)],     # one-hot staging
        ),
        compiler_params=pltpu.CompilerParams(**compiler_kwargs),
    )(ids_2d, pe_table)

    return out_flat[:n].reshape(*lead_shape, e)


def make_positional_encoding_table(max_len, d_model):
    """Matches the PyTorch buffer construction (f32)."""
    position = jnp.arange(max_len, dtype=jnp.float32)[:, None]              # [V, 1]
    div_term = jnp.exp(jnp.arange(0, d_model, 2, dtype=jnp.float32)
                       * (-math.log(10000.0) / d_model))                    # [E/2]
    pe = jnp.zeros((max_len, d_model), dtype=jnp.float32)
    pe = pe.at[:, 0::2].set(jnp.sin(position * div_term))
    pe = pe.at[:, 1::2].set(jnp.cos(position * div_term))
    return pe


def _reference(position_ids, pe_table):
    return pe_table[position_ids]            # F.embedding(position_ids, pe)


if __name__ == "__main__":
    # Small shapes consistent with the module: d_model=128, max_len=512,
    # position_ids of shape [batch=2, seq=8].
    B, L = 2, 8
    D_MODEL, MAX_LEN = 128, 512

    key = jax.random.PRNGKey(0)
    pe = make_positional_encoding_table(MAX_LEN, D_MODEL)
    position_ids = jax.random.randint(key, (B, L), minval=0, maxval=MAX_LEN,
                                      dtype=jnp.int32)

    out = positional_encoding_lookup(position_ids, pe)
    out = jax.block_until_ready(out)

    ref = _reference(position_ids, pe)
    assert out.shape == (B, L, D_MODEL)
    assert jnp.allclose(out, ref, atol=1e-5, rtol=1e-5), "mismatch vs reference"

    print("KERNEL_OK")
</pallas_src>

<mosaic_0001>
module attributes {stable_mosaic.version = 11 : i64} {
  func.func @_pos_encoding_gather_kernel(%arg0: i32, %arg1: memref<256x1xi32, #tpu.memory_space<vmem>>, %arg2: memref<512x128xf32, #tpu.memory_space<vmem>>, %arg3: memref<256x128xf32, #tpu.memory_space<vmem>>, %arg4: memref<256x512xf32, #tpu.memory_space<vmem>>) attributes {dimension_semantics = [#tpu.dimension_semantics<parallel>], iteration_bounds = array<i64: 1>, scalar_prefetch = 0 : i64, scratch_operands = 1 : i64, tpu.core_type = #tpu.core_type<tc>, window_params = [{transform_indices = @transform_0, window_bounds = array<i64: 256, 1>}, {pipeline_mode = #tpu.pipeline_mode<synchronous>, transform_indices = @transform_1, window_bounds = array<i64: 512, 128>}, {transform_indices = @transform_2, window_bounds = array<i64: 256, 128>}]} {
    %c0 = arith.constant 0 : index
    %c0_0 = arith.constant 0 : index
    %0 = vector.load %arg1[%c0, %c0_0] : memref<256x1xi32, #tpu.memory_space<vmem>>, vector<256x1xi32>
    %1 = tpu.iota {dimensions = array<i32: 1>} : vector<256x512xi32>
    %2 = vector.broadcast %0 : vector<256x1xi32> to vector<256x512xi32>
    %3 = arith.cmpi eq, %1, %2 : vector<256x512xi32>
    %cst = arith.constant 1.000000e+00 : f32
    %cst_1 = arith.constant 0.000000e+00 : f32
    %4 = vector.broadcast %cst : f32 to vector<256x512xf32>
    %5 = vector.broadcast %cst_1 : f32 to vector<256x512xf32>
    %6 = arith.select %3, %4, %5 : vector<256x512xi1>, vector<256x512xf32>
    %c0_2 = arith.constant 0 : index
    %c0_3 = arith.constant 0 : index
    %7 = vector.load %arg4[%c0_2, %c0_3] : memref<256x512xf32, #tpu.memory_space<vmem>>, vector<256x512xf32>
    tpu.vector_store %arg4[%c0_2, %c0_3], %6 {strides = array<i32>} : memref<256x512xf32, #tpu.memory_space<vmem>>, vector<256x512xf32>,
    %c0_4 = arith.constant 0 : index
    %c0_5 = arith.constant 0 : index
    %8 = vector.load %arg4[%c0_4, %c0_5] : memref<256x512xf32, #tpu.memory_space<vmem>>, vector<256x512xf32>
    %c0_6 = arith.constant 0 : index
    %c0_7 = arith.constant 0 : index
    %9 = vector.load %arg2[%c0_6, %c0_7] : memref<512x128xf32, #tpu.memory_space<vmem>>, vector<512x128xf32>
    %cst_8 = arith.constant dense<0.000000e+00> : vector<256x128xf32>
    %10 = tpu.matmul %8, %9, %cst_8 {dimension_numbers = #tpu.dot_dimension_numbers<[1], [0], [0], [1], [0, 0, 1, 1], [], []>} : vector<256x512xf32>, vector<512x128xf32>, vector<256x128xf32> -> vector<256x128xf32>
    %c0_9 = arith.constant 0 : index
    %c0_10 = arith.constant 0 : index
    %11 = vector.load %arg3[%c0_9, %c0_10] : memref<256x128xf32, #tpu.memory_space<vmem>>, vector<256x128xf32>
    tpu.vector_store %arg3[%c0_9, %c0_10], %10 {strides = array<i32>} : memref<256x128xf32, #tpu.memory_space<vmem>>, vector<256x128xf32>,
    return
  }
  func.func @transform_0(%arg0: i32) -> (i32, i32) {
    %c0_i32 = arith.constant 0 : i32
    %c0_i32_0 = arith.constant 0 : i32
    return %arg0, %c0_i32 : i32, i32
  }
  func.func @transform_1(%arg0: i32) -> (i32, i32) {
    %c0_i32 = arith.constant 0 : i32
    %c0_i32_0 = arith.constant 0 : i32
    %c0_i32_1 = arith.constant 0 : i32
    return %c0_i32, %c0_i32_0 : i32, i32
  }
  func.func @transform_2(%arg0: i32) -> (i32, i32) {
    %c0_i32 = arith.constant 0 : i32
    %c0_i32_0 = arith.constant 0 : i32
    return %arg0, %c0_i32 : i32, i32
  }
}

</mosaic_0001>

<llo_original>
// kernel: tpu_custom_call.1
$region0: #{tpu_custom_call.1}
  #allocation0 [shape = 'u32[]', space=smem, size = 0x4, offset = 0x4, fixed_abs, tag = 'smem constant byte address 0x4 - core index']
  #allocation1 [shape = 'u32[144,128]{1,0:T(1,128)}', space=vmem, size = 0x12000, scoped, tag = 'internal scratch']
  #allocation2 [shape = 'f32[256,512]{1,0:T(8,128)}', space=vmem, size = 0x80000, scoped, tag = 'scratch operand']
  %s0 = inlined_call_operand.vmem [shape: s32[256,1], index: 0, kind: input, shape index: {}]
  %s1 = inlined_call_operand.hbm [shape: f32[512,128], index: 1, kind: input, shape index: {}]
  %s2 = inlined_call_operand.hbm [shape: f32[256,128], index: 2, kind: output, shape index: {}]
  %s3 = sld [smem:[#allocation0]]
  $region22: #{tpu_custom_call.1} parent=0
    _
  %s5 = ssub.s32 1, %s3
  %s6 = scalar_select 0, %s5, %s3
  $region1: #{tpu_custom_call.1} parent=0
    #allocation3 [shape = 'u8[262144]{0}', space=vmem, size = 0x40000, scoped, tag = 'input window, operand 1, single buffered']
    #allocation4 [shape = 's32[1]{0}', space=sflag, size = 0x4, scoped, tag = 'scoped memory for tpu_custom_call.1']
    #allocation5 [shape = 's32[1]{0}', space=sflag, size = 0x4, scoped, tag = 'scoped memory for tpu_custom_call.1']
    #allocation6 [shape = 'u8[131072]{0}', space=vmem, size = 0x20000, scoped, tag = 'output window, operand 0, single buffered']
    %7 = vsyncpa [#allocation4], 0
    %8 = vsyncpa [#allocation5], 0
    // Predicated region
    $region2: #{tpu_custom_call.1} parent=1 // pred_check
      _
    $region3: #{tpu_custom_call.1} parent=1 // pred_check_branch
      %10 = sbr.rel (0) target = $region5
    $region4: #{tpu_custom_call.1} parent=1 // pred_region
      _
    $region5: #{tpu_custom_call.1} parent=1 // pred_fallthru
      _
    // Predicated region
    $region6: #{tpu_custom_call.1} parent=1 // pred_check
      _
    $region7: #{tpu_custom_call.1} parent=1 // pred_check_branch
      %12 = sbr.rel (0) target = $region9
    $region8: #{tpu_custom_call.1} parent=1 // pred_region
      %s14 = ssub.s32 8192, 8192
      %15 = vsyncadd [#allocation4], %s14
      %s16 = sshll.u32 [#allocation3], 4
      %s17 = int_to_ptr.vmem [resolvable:$true] %s16
      %22 = dma.hbm_to_vmem [thread:$0]  %s1, 8192, %s17, [#allocation4], 128, 128, 8
    $region9: #{tpu_custom_call.1} parent=1 // pred_fallthru
      _
    // Predicated region
    $region10: #{tpu_custom_call.1} parent=1 // pred_check
      _
    $region11: #{tpu_custom_call.1} parent=1 // pred_check_branch
      %24 = sbr.rel (0) target = $region13
    $region12: #{tpu_custom_call.1} parent=1 // pred_region
      %25 = dma.done [#allocation4], 8192
    $region13: #{tpu_custom_call.1} parent=1 // pred_fallthru
      _
    %v26 = vld [vmem:[%s0] sm:$0xff]
    %v27 = vld [vmem:[%s0 + $0x8] sm:$0xff]
    %v28 = vld [vmem:[%s0 + $0x10] sm:$0xff]
    %v29 = vld [vmem:[%s0 + $0x18] sm:$0xff]
    %v30 = vld [vmem:[%s0 + $0x20] sm:$0xff]
    %v31 = vld [vmem:[%s0 + $0x28] sm:$0xff]
    %v32 = vld [vmem:[%s0 + $0x30] sm:$0xff]
    %v33 = vld [vmem:[%s0 + $0x38] sm:$0xff]
    %v34 = vld [vmem:[%s0 + $0x40] sm:$0xff]
    %v35 = vld [vmem:[%s0 + $0x48] sm:$0xff]
    %v36 = vld [vmem:[%s0 + $0x50] sm:$0xff]
    %v37 = vld [vmem:[%s0 + $0x58] sm:$0xff]
    %v38 = vld [vmem:[%s0 + $0x60] sm:$0xff]
    %v39 = vld [vmem:[%s0 + $0x68] sm:$0xff]
    %v40 = vld [vmem:[%s0 + $0x70] sm:$0xff]
    %v41 = vld [vmem:[%s0 + $0x78] sm:$0xff]
    %v42 = vld [vmem:[%s0 + $0x80] sm:$0xff]
    %v43 = vld [vmem:[%s0 + $0x88] sm:$0xff]
    %v44 = vld [vmem:[%s0 + $0x90] sm:$0xff]
    %v45 = vld [vmem:[%s0 + $0x98] sm:$0xff]
    %v46 = vld [vmem:[%s0 + $0xa0] sm:$0xff]
    %v47 = vld [vmem:[%s0 + $0xa8] sm:$0xff]
    %v48 = vld [vmem:[%s0 + $0xb0] sm:$0xff]
    %v49 = vld [vmem:[%s0 + $0xb8] sm:$0xff]
    %v50 = vld [vmem:[%s0 + $0xc0] sm:$0xff]
    %v51 = vld [vmem:[%s0 + $0xc8] sm:$0xff]
    %v52 = vld [vmem:[%s0 + $0xd0] sm:$0xff]
    %v53 = vld [vmem:[%s0 + $0xd8] sm:$0xff]
    %v54 = vld [vmem:[%s0 + $0xe0] sm:$0xff]
    %v55 = vld [vmem:[%s0 + $0xe8] sm:$0xff]
    %v56 = vld [vmem:[%s0 + $0xf0] sm:$0xff]
    %v57 = vld [vmem:[%s0 + $0xf8] sm:$0xff]
    %v58 = vlaneseq
    %v59 = vand.u32 %v58, 127
    %v60 = vadd.s32 %v59, 128
    %v61 = vadd.s32 %v59, 256
    %v62 = vadd.s32 %v59, 384
    %63 = vset.pattern.permute.xlu0 0
    %64 = vperm.xlu0 %63, %v26
    %v65 = vpop.permute.xlu0 %64
    %66 = vset.pattern.permute.xlu0 0
    %67 = vperm.xlu0 %66, %v27
    %v68 = vpop.permute.xlu0 %67
    %69 = vset.pattern.permute.xlu0 0
    %70 = vperm.xlu0 %69, %v28
    %v71 = vpop.permute.xlu0 %70
    %72 = vset.pattern.permute.xlu0 0
    %73 = vperm.xlu0 %72, %v29
    %v74 = vpop.permute.xlu0 %73
    %75 = vset.pattern.permute.xlu0 0
    %76 = vperm.xlu0 %75, %v30
    %v77 = vpop.permute.xlu0 %76
    %78 = vset.pattern.permute.xlu0 0
    %79 = vperm.xlu0 %78, %v31
    %v80 = vpop.permute.xlu0 %79
    %81 = vset.pattern.permute.xlu0 0
    %82 = vperm.xlu0 %81, %v32
    %v83 = vpop.permute.xlu0 %82
    %84 = vset.pattern.permute.xlu0 0
    %85 = vperm.xlu0 %84, %v33
    %v86 = vpop.permute.xlu0 %85
    %87 = vset.pattern.permute.xlu0 0
    %88 = vperm.xlu0 %87, %v34
    %v89 = vpop.permute.xlu0 %88
    %90 = vset.pattern.permute.xlu0 0
    %91 = vperm.xlu0 %90, %v35
    %v92 = vpop.permute.xlu0 %91
    %93 = vset.pattern.permute.xlu0 0
    %94 = vperm.xlu0 %93, %v36
    %v95 = vpop.permute.xlu0 %94
    %96 = vset.pattern.permute.xlu0 0
    %97 = vperm.xlu0 %96, %v37
    %v98 = vpop.permute.xlu0 %97
    %99 = vset.pattern.permute.xlu0 0
    %100 = vperm.xlu0 %99, %v38
    %v101 = vpop.permute.xlu0 %100
    %102 = vset.pattern.permute.xlu0 0
    %103 = vperm.xlu0 %102, %v39
    %v104 = vpop.permute.xlu0 %103
    %105 = vset.pattern.permute.xlu0 0
    %106 = vperm.xlu0 %105, %v40
    %v107 = vpop.permute.xlu0 %106
    %108 = vset.pattern.permute.xlu0 0
    %109 = vperm.xlu0 %108, %v41
    %v110 = vpop.permute.xlu0 %109
    %111 = vset.pattern.permute.xlu0 0
    %112 = vperm.xlu0 %111, %v42
    %v113 = vpop.permute.xlu0 %112
    %114 = vset.pattern.permute.xlu0 0
    %115 = vperm.xlu0 %114, %v43
    %v116 = vpop.permute.xlu0 %115
    %117 = vset.pattern.permute.xlu0 0
    %118 = vperm.xlu0 %117, %v44
    %v119 = vpop.permute.xlu0 %118
    %120 = vset.pattern.permute.xlu0 0
    %121 = vperm.xlu0 %120, %v45
    %v122 = vpop.permute.xlu0 %121
    %123 = vset.pattern.permute.xlu0 0
    %124 = vperm.xlu0 %123, %v46
    %v125 = vpop.permute.xlu0 %124
    %126 = vset.pattern.permute.xlu0 0
    %127 = vperm.xlu0 %126, %v47
    %v128 = vpop.permute.xlu0 %127
    %129 = vset.pattern.permute.xlu0 0
    %130 = vperm.xlu0 %129, %v48
    %v131 = vpop.permute.xlu0 %130
    %132 = vset.pattern.permute.xlu0 0
    %133 = vperm.xlu0 %132, %v49
    %v134 = vpop.permute.xlu0 %133
    %135 = vset.pattern.permute.xlu0 0
    %136 = vperm.xlu0 %135, %v50
    %v137 = vpop.permute.xlu0 %136
    %138 = vset.pattern.permute.xlu0 0
    %139 = vperm.xlu0 %138, %v51
    %v140 = vpop.permute.xlu0 %139
    %141 = vset.pattern.permute.xlu0 0
    %142 = vperm.xlu0 %141, %v52
    %v143 = vpop.permute.xlu0 %142
    %144 = vset.pattern.permute.xlu0 0
    %145 = vperm.xlu0 %144, %v53
    %v146 = vpop.permute.xlu0 %145
    %147 = vset.pattern.permute.xlu0 0
    %148 = vperm.xlu0 %147, %v54
    %v149 = vpop.permute.xlu0 %148
    %150 = vset.pattern.permute.xlu0 0
    %151 = vperm.xlu0 %150, %v55
    %v152 = vpop.permute.xlu0 %151
    %153 = vset.pattern.permute.xlu0 0
    %154 = vperm.xlu0 %153, %v56
    %v155 = vpop.permute.xlu0 %154
    %156 = vset.pattern.permute.xlu0 0
    %157 = vperm.xlu0 %156, %v57
    %v158 = vpop.permute.xlu0 %157
    %vm159 = vcmp.eq.s32.totalorder %v59, %v65
    %vm160 = vcmp.eq.s32.totalorder %v60, %v65
    %vm161 = vcmp.eq.s32.totalorder %v61, %v65
    %vm162 = vcmp.eq.s32.totalorder %v62, %v65
    %vm163 = vcmp.eq.s32.totalorder %v59, %v68
    %vm164 = vcmp.eq.s32.totalorder %v60, %v68
    %vm165 = vcmp.eq.s32.totalorder %v61, %v68
    %vm166 = vcmp.eq.s32.totalorder %v62, %v68
    %vm167 = vcmp.eq.s32.totalorder %v59, %v71
    %vm168 = vcmp.eq.s32.totalorder %v60, %v71
    %vm169 = vcmp.eq.s32.totalorder %v61, %v71
    %vm170 = vcmp.eq.s32.totalorder %v62, %v71
    %vm171 = vcmp.eq.s32.totalorder %v59, %v74
    %vm172 = vcmp.eq.s32.totalorder %v60, %v74
    %vm173 = vcmp.eq.s32.totalorder %v61, %v74
    %vm174 = vcmp.eq.s32.totalorder %v62, %v74
    %vm175 = vcmp.eq.s32.totalorder %v59, %v77
    %vm176 = vcmp.eq.s32.totalorder %v60, %v77
    %vm177 = vcmp.eq.s32.totalorder %v61, %v77
    %vm178 = vcmp.eq.s32.totalorder %v62, %v77
    %vm179 = vcmp.eq.s32.totalorder %v59, %v80
    %vm180 = vcmp.eq.s32.totalorder %v60, %v80
    %vm181 = vcmp.eq.s32.totalorder %v61, %v80
    %vm182 = vcmp.eq.s32.totalorder %v62, %v80
    %vm183 = vcmp.eq.s32.totalorder %v59, %v83
    %vm184 = vcmp.eq.s32.totalorder %v60, %v83
    %vm185 = vcmp.eq.s32.totalorder %v61, %v83
    %vm186 = vcmp.eq.s32.totalorder %v62, %v83
    %vm187 = vcmp.eq.s32.totalorder %v59, %v86
    %vm188 = vcmp.eq.s32.totalorder %v60, %v86
    %vm189 = vcmp.eq.s32.totalorder %v61, %v86
    %vm190 = vcmp.eq.s32.totalorder %v62, %v86
    %vm191 = vcmp.eq.s32.totalorder %v59, %v89
    %vm192 = vcmp.eq.s32.totalorder %v60, %v89
    %vm193 = vcmp.eq.s32.totalorder %v61, %v89
    %vm194 = vcmp.eq.s32.totalorder %v62, %v89
    %vm195 = vcmp.eq.s32.totalorder %v59, %v92
    %vm196 = vcmp.eq.s32.totalorder %v60, %v92
    %vm197 = vcmp.eq.s32.totalorder %v61, %v92
    %vm198 = vcmp.eq.s32.totalorder %v62, %v92
    %vm199 = vcmp.eq.s32.totalorder %v59, %v95
    %vm200 = vcmp.eq.s32.totalorder %v60, %v95
    %vm201 = vcmp.eq.s32.totalorder %v61, %v95
    %vm202 = vcmp.eq.s32.totalorder %v62, %v95
    %vm203 = vcmp.eq.s32.totalorder %v59, %v98
    %vm204 = vcmp.eq.s32.totalorder %v60, %v98
    %vm205 = vcmp.eq.s32.totalorder %v61, %v98
    %vm206 = vcmp.eq.s32.totalorder %v62, %v98
    %vm207 = vcmp.eq.s32.totalorder %v59, %v101
    %vm208 = vcmp.eq.s32.totalorder %v60, %v101
    %vm209 = vcmp.eq.s32.totalorder %v61, %v101
    %vm210 = vcmp.eq.s32.totalorder %v62, %v101
    %vm211 = vcmp.eq.s32.totalorder %v59, %v104
    %vm212 = vcmp.eq.s32.totalorder %v60, %v104
    %vm213 = vcmp.eq.s32.totalorder %v61, %v104
    %vm214 = vcmp.eq.s32.totalorder %v62, %v104
    %vm215 = vcmp.eq.s32.totalorder %v59, %v107
    %vm216 = vcmp.eq.s32.totalorder %v60, %v107
    %vm217 = vcmp.eq.s32.totalorder %v61, %v107
    %vm218 = vcmp.eq.s32.totalorder %v62, %v107
    %vm219 = vcmp.eq.s32.totalorder %v59, %v110
    %vm220 = vcmp.eq.s32.totalorder %v60, %v110
    %vm221 = vcmp.eq.s32.totalorder %v61, %v110
    %vm222 = vcmp.eq.s32.totalorder %v62, %v110
    %vm223 = vcmp.eq.s32.totalorder %v59, %v113
    %vm224 = vcmp.eq.s32.totalorder %v60, %v113
    %vm225 = vcmp.eq.s32.totalorder %v61, %v113
    %vm226 = vcmp.eq.s32.totalorder %v62, %v113
    %vm227 = vcmp.eq.s32.totalorder %v59, %v116
    %vm228 = vcmp.eq.s32.totalorder %v60, %v116
    %vm229 = vcmp.eq.s32.totalorder %v61, %v116
    %vm230 = vcmp.eq.s32.totalorder %v62, %v116
    %vm231 = vcmp.eq.s32.totalorder %v59, %v119
    %vm232 = vcmp.eq.s32.totalorder %v60, %v119
    %vm233 = vcmp.eq.s32.totalorder %v61, %v119
    %vm234 = vcmp.eq.s32.totalorder %v62, %v119
    %vm235 = vcmp.eq.s32.totalorder %v59, %v122
    %vm236 = vcmp.eq.s32.totalorder %v60, %v122
    %vm237 = vcmp.eq.s32.totalorder %v61, %v122
    %vm238 = vcmp.eq.s32.totalorder %v62, %v122
    %vm239 = vcmp.eq.s32.totalorder %v59, %v125
    %vm240 = vcmp.eq.s32.totalorder %v60, %v125
    %vm241 = vcmp.eq.s32.totalorder %v61, %v125
    %vm242 = vcmp.eq.s32.totalorder %v62, %v125
    %vm243 = vcmp.eq.s32.totalorder %v59, %v128
    %vm244 = vcmp.eq.s32.totalorder %v60, %v128
    %vm245 = vcmp.eq.s32.totalorder %v61, %v128
    %vm246 = vcmp.eq.s32.totalorder %v62, %v128
    %vm247 = vcmp.eq.s32.totalorder %v59, %v131
    %vm248 = vcmp.eq.s32.totalorder %v60, %v131
    %vm249 = vcmp.eq.s32.totalorder %v61, %v131
    %vm250 = vcmp.eq.s32.totalorder %v62, %v131
    %vm251 = vcmp.eq.s32.totalorder %v59, %v134
    %vm252 = vcmp.eq.s32.totalorder %v60, %v134
    %vm253 = vcmp.eq.s32.totalorder %v61, %v134
    %vm254 = vcmp.eq.s32.totalorder %v62, %v134
    %vm255 = vcmp.eq.s32.totalorder %v59, %v137
    %vm256 = vcmp.eq.s32.totalorder %v60, %v137
    %vm257 = vcmp.eq.s32.totalorder %v61, %v137
    %vm258 = vcmp.eq.s32.totalorder %v62, %v137
    %vm259 = vcmp.eq.s32.totalorder %v59, %v140
    %vm260 = vcmp.eq.s32.totalorder %v60, %v140
    %vm261 = vcmp.eq.s32.totalorder %v61, %v140
    %vm262 = vcmp.eq.s32.totalorder %v62, %v140
    %vm263 = vcmp.eq.s32.totalorder %v59, %v143
    %vm264 = vcmp.eq.s32.totalorder %v60, %v143
    %vm265 = vcmp.eq.s32.totalorder %v61, %v143
    %vm266 = vcmp.eq.s32.totalorder %v62, %v143
    %vm267 = vcmp.eq.s32.totalorder %v59, %v146
    %vm268 = vcmp.eq.s32.totalorder %v60, %v146
    %vm269 = vcmp.eq.s32.totalorder %v61, %v146
    %vm270 = vcmp.eq.s32.totalorder %v62, %v146
    %vm271 = vcmp.eq.s32.totalorder %v59, %v149
    %vm272 = vcmp.eq.s32.totalorder %v60, %v149
    %vm273 = vcmp.eq.s32.totalorder %v61, %v149
    %vm274 = vcmp.eq.s32.totalorder %v62, %v149
    %vm275 = vcmp.eq.s32.totalorder %v59, %v152
    %vm276 = vcmp.eq.s32.totalorder %v60, %v152
    %vm277 = vcmp.eq.s32.totalorder %v61, %v152
    %vm278 = vcmp.eq.s32.totalorder %v62, %v152
    %vm279 = vcmp.eq.s32.totalorder %v59, %v155
    %vm280 = vcmp.eq.s32.totalorder %v60, %v155
    %vm281 = vcmp.eq.s32.totalorder %v61, %v155
    %vm282 = vcmp.eq.s32.totalorder %v62, %v155
    %vm283 = vcmp.eq.s32.totalorder %v59, %v158
    %vm284 = vcmp.eq.s32.totalorder %v60, %v158
    %vm285 = vcmp.eq.s32.totalorder %v61, %v158
    %vm286 = vcmp.eq.s32.totalorder %v62, %v158
    %v287 = vsel %vm159, 1.0, 0.0
    %v288 = vsel %vm160, 1.0, 0.0
    %v289 = vsel %vm161, 1.0, 0.0
    %v290 = vsel %vm162, 1.0, 0.0
    %v291 = vsel %vm163, 1.0, 0.0
    %v292 = vsel %vm164, 1.0, 0.0
    %v293 = vsel %vm165, 1.0, 0.0
    %v294 = vsel %vm166, 1.0, 0.0
    %v295 = vsel %vm167, 1.0, 0.0
    %v296 = vsel %vm168, 1.0, 0.0
    %v297 = vsel %vm169, 1.0, 0.0
    %v298 = vsel %vm170, 1.0, 0.0
    %v299 = vsel %vm171, 1.0, 0.0
    %v300 = vsel %vm172, 1.0, 0.0
    %v301 = vsel %vm173, 1.0, 0.0
    %v302 = vsel %vm174, 1.0, 0.0
    %v303 = vsel %vm175, 1.0, 0.0
    %v304 = vsel %vm176, 1.0, 0.0
    %v305 = vsel %vm177, 1.0, 0.0
    %v306 = vsel %vm178, 1.0, 0.0
    %v307 = vsel %vm179, 1.0, 0.0
    %v308 = vsel %vm180, 1.0, 0.0
    %v309 = vsel %vm181, 1.0, 0.0
    %v310 = vsel %vm182, 1.0, 0.0
    %v311 = vsel %vm183, 1.0, 0.0
    %v312 = vsel %vm184, 1.0, 0.0
    %v313 = vsel %vm185, 1.0, 0.0
    %v314 = vsel %vm186, 1.0, 0.0
    %v315 = vsel %vm187, 1.0, 0.0
    %v316 = vsel %vm188, 1.0, 0.0
    %v317 = vsel %vm189, 1.0, 0.0
    %v318 = vsel %vm190, 1.0, 0.0
    %v319 = vsel %vm191, 1.0, 0.0
    %v320 = vsel %vm192, 1.0, 0.0
    %v321 = vsel %vm193, 1.0, 0.0
    %v322 = vsel %vm194, 1.0, 0.0
    %v323 = vsel %vm195, 1.0, 0.0
    %v324 = vsel %vm196, 1.0, 0.0
    %v325 = vsel %vm197, 1.0, 0.0
    %v326 = vsel %vm198, 1.0, 0.0
    %v327 = vsel %vm199, 1.0, 0.0
    %v328 = vsel %vm200, 1.0, 0.0
    %v329 = vsel %vm201, 1.0, 0.0
    %v330 = vsel %vm202, 1.0, 0.0
    %v331 = vsel %vm203, 1.0, 0.0
    %v332 = vsel %vm204, 1.0, 0.0
    %v333 = vsel %vm205, 1.0, 0.0
    %v334 = vsel %vm206, 1.0, 0.0
    %v335 = vsel %vm207, 1.0, 0.0
    %v336 = vsel %vm208, 1.0, 0.0
    %v337 = vsel %vm209, 1.0, 0.0
    %v338 = vsel %vm210, 1.0, 0.0
    %v339 = vsel %vm211, 1.0, 0.0
    %v340 = vsel %vm212, 1.0, 0.0
    %v341 = vsel %vm213, 1.0, 0.0
    %v342 = vsel %vm214, 1.0, 0.0
    %v343 = vsel %vm215, 1.0, 0.0
    %v344 = vsel %vm216, 1.0, 0.0
    %v345 = vsel %vm217, 1.0, 0.0
    %v346 = vsel %vm218, 1.0, 0.0
    %v347 = vsel %vm219, 1.0, 0.0
    %v348 = vsel %vm220, 1.0, 0.0
    %v349 = vsel %vm221, 1.0, 0.0
    %v350 = vsel %vm222, 1.0, 0.0
    %v351 = vsel %vm223, 1.0, 0.0
    %v352 = vsel %vm224, 1.0, 0.0
    %v353 = vsel %vm225, 1.0, 0.0
    %v354 = vsel %vm226, 1.0, 0.0
    %v355 = vsel %vm227, 1.0, 0.0
    %v356 = vsel %vm228, 1.0, 0.0
    %v357 = vsel %vm229, 1.0, 0.0
    %v358 = vsel %vm230, 1.0, 0.0
    %v359 = vsel %vm231, 1.0, 0.0
    %v360 = vsel %vm232, 1.0, 0.0
    %v361 = vsel %vm233, 1.0, 0.0
    %v362 = vsel %vm234, 1.0, 0.0
    %v363 = vsel %vm235, 1.0, 0.0
    %v364 = vsel %vm236, 1.0, 0.0
    %v365 = vsel %vm237, 1.0, 0.0
    %v366 = vsel %vm238, 1.0, 0.0
    %v367 = vsel %vm239, 1.0, 0.0
    %v368 = vsel %vm240, 1.0, 0.0
    %v369 = vsel %vm241, 1.0, 0.0
    %v370 = vsel %vm242, 1.0, 0.0
    %v371 = vsel %vm243, 1.0, 0.0
    %v372 = vsel %vm244, 1.0, 0.0
    %v373 = vsel %vm245, 1.0, 0.0
    %v374 = vsel %vm246, 1.0, 0.0
    %v375 = vsel %vm247, 1.0, 0.0
    %v376 = vsel %vm248, 1.0, 0.0
    %v377 = vsel %vm249, 1.0, 0.0
    %v378 = vsel %vm250, 1.0, 0.0
    %v379 = vsel %vm251, 1.0, 0.0
    %v380 = vsel %vm252, 1.0, 0.0
    %v381 = vsel %vm253, 1.0, 0.0
    %v382 = vsel %vm254, 1.0, 0.0
    %v383 = vsel %vm255, 1.0, 0.0
    %v384 = vsel %vm256, 1.0, 0.0
    %v385 = vsel %vm257, 1.0, 0.0
    %v386 = vsel %vm258, 1.0, 0.0
    %v387 = vsel %vm259, 1.0, 0.0
    %v388 = vsel %vm260, 1.0, 0.0
    %v389 = vsel %vm261, 1.0, 0.0
    %v390 = vsel %vm262, 1.0, 0.0
    %v391 = vsel %vm263, 1.0, 0.0
    %v392 = vsel %vm264, 1.0, 0.0
    %v393 = vsel %vm265, 1.0, 0.0
    %v394 = vsel %vm266, 1.0, 0.0
    %v395 = vsel %vm267, 1.0, 0.0
    %v396 = vsel %vm268, 1.0, 0.0
    %v397 = vsel %vm269, 1.0, 0.0
    %v398 = vsel %vm270, 1.0, 0.0
    %v399 = vsel %vm271, 1.0, 0.0
    %v400 = vsel %vm272, 1.0, 0.0
    %v401 = vsel %vm273, 1.0, 0.0
    %v402 = vsel %vm274, 1.0, 0.0
    %v403 = vsel %vm275, 1.0, 0.0
    %v404 = vsel %vm276, 1.0, 0.0
    %v405 = vsel %vm277, 1.0, 0.0
    %v406 = vsel %vm278, 1.0, 0.0
    %v407 = vsel %vm279, 1.0, 0.0
    %v408 = vsel %vm280, 1.0, 0.0
    %v409 = vsel %vm281, 1.0, 0.0
    %v410 = vsel %vm282, 1.0, 0.0
    %v411 = vsel %vm283, 1.0, 0.0
    %v412 = vsel %vm284, 1.0, 0.0
    %v413 = vsel %vm285, 1.0, 0.0
    %v414 = vsel %vm286, 1.0, 0.0
    %415 = vst [vmem:[#allocation2] sm:$0xff] %v287
    %416 = vst [vmem:[#allocation2 + $0x8] sm:$0xff] %v288
    %417 = vst [vmem:[#allocation2 + $0x10] sm:$0xff] %v289
    %418 = vst [vmem:[#allocation2 + $0x18] sm:$0xff] %v290
    %419 = vst [vmem:[#allocation2 + $0x20] sm:$0xff] %v291
    %420 = vst [vmem:[#allocation2 + $0x28] sm:$0xff] %v292
    %421 = vst [vmem:[#allocation2 + $0x30] sm:$0xff] %v293
    %422 = vst [vmem:[#allocation2 + $0x38] sm:$0xff] %v294
    %423 = vst [vmem:[#allocation2 + $0x40] sm:$0xff] %v295
    %424 = vst [vmem:[#allocation2 + $0x48] sm:$0xff] %v296
    %425 = vst [vmem:[#allocation2 + $0x50] sm:$0xff] %v297
    %426 = vst [vmem:[#allocation2 + $0x58] sm:$0xff] %v298
    %427 = vst [vmem:[#allocation2 + $0x60] sm:$0xff] %v299
    %428 = vst [vmem:[#allocation2 + $0x68] sm:$0xff] %v300
    %429 = vst [vmem:[#allocation2 + $0x70] sm:$0xff] %v301
    %430 = vst [vmem:[#allocation2 + $0x78] sm:$0xff] %v302
    %431 = vst [vmem:[#allocation2 + $0x80] sm:$0xff] %v303
    %432 = vst [vmem:[#allocation2 + $0x88] sm:$0xff] %v304
    %433 = vst [vmem:[#allocation2 + $0x90] sm:$0xff] %v305
    %434 = vst [vmem:[#allocation2 + $0x98] sm:$0xff] %v306
    %435 = vst [vmem:[#allocation2 + $0xa0] sm:$0xff] %v307
    %436 = vst [vmem:[#allocation2 + $0xa8] sm:$0xff] %v308
    %437 = vst [vmem:[#allocation2 + $0xb0] sm:$0xff] %v309
    %438 = vst [vmem:[#allocation2 + $0xb8] sm:$0xff] %v310
    %439 = vst [vmem:[#allocation2 + $0xc0] sm:$0xff] %v311
    %440 = vst [vmem:[#allocation2 + $0xc8] sm:$0xff] %v312
    %441 = vst [vmem:[#allocation2 + $0xd0] sm:$0xff] %v313
    %442 = vst [vmem:[#allocation2 + $0xd8] sm:$0xff] %v314
    %443 = vst [vmem:[#allocation2 + $0xe0] sm:$0xff] %v315
    %444 = vst [vmem:[#allocation2 + $0xe8] sm:$0xff] %v316
    %445 = vst [vmem:[#allocation2 + $0xf0] sm:$0xff] %v317
    %446 = vst [vmem:[#allocation2 + $0xf8] sm:$0xff] %v318
    %447 = vst [vmem:[#allocation2 + $0x100] sm:$0xff] %v319
    %448 = vst [vmem:[#allocation2 + $0x108] sm:$0xff] %v320
    %449 = vst [vmem:[#allocation2 + $0x110] sm:$0xff] %v321
    %450 = vst [vmem:[#allocation2 + $0x118] sm:$0xff] %v322
    %451 = vst [vmem:[#allocation2 + $0x120] sm:$0xff] %v323
    %452 = vst [vmem:[#allocation2 + $0x128] sm:$0xff] %v324
    %453 = vst [vmem:[#allocation2 + $0x130] sm:$0xff] %v325
    %454 = vst [vmem:[#allocation2 + $0x138] sm:$0xff] %v326
    %455 = vst [vmem:[#allocation2 + $0x140] sm:$0xff] %v327
    %456 = vst [vmem:[#allocation2 + $0x148] sm:$0xff] %v328
    %457 = vst [vmem:[#allocation2 + $0x150] sm:$0xff] %v329
    %458 = vst [vmem:[#allocation2 + $0x158] sm:$0xff] %v330
    %459 = vst [vmem:[#allocation2 + $0x160] sm:$0xff] %v331
    %460 = vst [vmem:[#allocation2 + $0x168] sm:$0xff] %v332
    %461 = vst [vmem:[#allocation2 + $0x170] sm:$0xff] %v333
    %462 = vst [vmem:[#allocation2 + $0x178] sm:$0xff] %v334
    %463 = vst [vmem:[#allocation2 + $0x180] sm:$0xff] %v335
    %464 = vst [vmem:[#allocation2 + $0x188] sm:$0xff] %v336
    %465 = vst [vmem:[#allocation2 + $0x190] sm:$0xff] %v337
    %466 = vst [vmem:[#allocation2 + $0x198] sm:$0xff] %v338
    %467 = vst [vmem:[#allocation2 + $0x1a0] sm:$0xff] %v339
    %468 = vst [vmem:[#allocation2 + $0x1a8] sm:$0xff] %v340
    %469 = vst [vmem:[#allocation2 + $0x1b0] sm:$0xff] %v341
    %470 = vst [vmem:[#allocation2 + $0x1b8] sm:$0xff] %v342
    %471 = vst [vmem:[#allocation2 + $0x1c0] sm:$0xff] %v343
    %472 = vst [vmem:[#allocation2 + $0x1c8] sm:$0xff] %v344
    %473 = vst [vmem:[#allocation2 + $0x1d0] sm:$0xff] %v345
    %474 = vst [vmem:[#allocation2 + $0x1d8] sm:$0xff] %v346
    %475 = vst [vmem:[#allocation2 + $0x1e0] sm:$0xff] %v347
    %476 = vst [vmem:[#allocation2 + $0x1e8] sm:$0xff] %v348
    %477 = vst [vmem:[#allocation2 + $0x1f0] sm:$0xff] %v349
    %478 = vst [vmem:[#allocation2 + $0x1f8] sm:$0xff] %v350
    %479 = vst [vmem:[#allocation2 + $0x200] sm:$0xff] %v351
    %480 = vst [vmem:[#allocation2 + $0x208] sm:$0xff] %v352
    %481 = vst [vmem:[#allocation2 + $0x210] sm:$0xff] %v353
    %482 = vst [vmem:[#allocation2 + $0x218] sm:$0xff] %v354
    %483 = vst [vmem:[#allocation2 + $0x220] sm:$0xff] %v355
    %484 = vst [vmem:[#allocation2 + $0x228] sm:$0xff] %v356
    %485 = vst [vmem:[#allocation2 + $0x230] sm:$0xff] %v357
    %486 = vst [vmem:[#allocation2 + $0x238] sm:$0xff] %v358
    %487 = vst [vmem:[#allocation2 + $0x240] sm:$0xff] %v359
    %488 = vst [vmem:[#allocation2 + $0x248] sm:$0xff] %v360
    %489 = vst [vmem:[#allocation2 + $0x250] sm:$0xff] %v361
    %490 = vst [vmem:[#allocation2 + $0x258] sm:$0xff] %v362
    %491 = vst [vmem:[#allocation2 + $0x260] sm:$0xff] %v363
    %492 = vst [vmem:[#allocation2 + $0x268] sm:$0xff] %v364
    %493 = vst [vmem:[#allocation2 + $0x270] sm:$0xff] %v365
    %494 = vst [vmem:[#allocation2 + $0x278] sm:$0xff] %v366
    %495 = vst [vmem:[#allocation2 + $0x280] sm:$0xff] %v367
    %496 = vst [vmem:[#allocation2 + $0x288] sm:$0xff] %v368
    %497 = vst [vmem:[#allocation2 + $0x290] sm:$0xff] %v369
    %498 = vst [vmem:[#allocation2 + $0x298] sm:$0xff] %v370
    %499 = vst [vmem:[#allocation2 + $0x2a0] sm:$0xff] %v371
    %500 = vst [vmem:[#allocation2 + $0x2a8] sm:$0xff] %v372
    %501 = vst [vmem:[#allocation2 + $0x2b0] sm:$0xff] %v373
    %502 = vst [vmem:[#allocation2 + $0x2b8] sm:$0xff] %v374
    %503 = vst [vmem:[#allocation2 + $0x2c0] sm:$0xff] %v375
    %504 = vst [vmem:[#allocation2 + $0x2c8] sm:$0xff] %v376
    %505 = vst [vmem:[#allocation2 + $0x2d0] sm:$0xff] %v377
    %506 = vst [vmem:[#allocation2 + $0x2d8] sm:$0xff] %v378
    %507 = vst [vmem:[#allocation2 + $0x2e0] sm:$0xff] %v379
    %508 = vst [vmem:[#allocation2 + $0x2e8] sm:$0xff] %v380
    %509 = vst [vmem:[#allocation2 + $0x2f0] sm:$0xff] %v381
    %510 = vst [vmem:[#allocation2 + $0x2f8] sm:$0xff] %v382
    %511 = vst [vmem:[#allocation2 + $0x300] sm:$0xff] %v383
    %512 = vst [vmem:[#allocation2 + $0x308] sm:$0xff] %v384
    %513 = vst [vmem:[#allocation2 + $0x310] sm:$0xff] %v385
    %514 = vst [vmem:[#allocation2 + $0x318] sm:$0xff] %v386
    %515 = vst [vmem:[#allocation2 + $0x320] sm:$0xff] %v387
    %516 = vst [vmem:[#allocation2 + $0x328] sm:$0xff] %v388
    %517 = vst [vmem:[#allocation2 + $0x330] sm:$0xff] %v389
    %518 = vst [vmem:[#allocation2 + $0x338] sm:$0xff] %v390
    %519 = vst [vmem:[#allocation2 + $0x340] sm:$0xff] %v391
    %520 = vst [vmem:[#allocation2 + $0x348] sm:$0xff] %v392
    %521 = vst [vmem:[#allocation2 + $0x350] sm:$0xff] %v393
    %522 = vst [vmem:[#allocation2 + $0x358] sm:$0xff] %v394
    %523 = vst [vmem:[#allocation2 + $0x360] sm:$0xff] %v395
    %524 = vst [vmem:[#allocation2 + $0x368] sm:$0xff] %v396
    %525 = vst [vmem:[#allocation2 + $0x370] sm:$0xff] %v397
    %526 = vst [vmem:[#allocation2 + $0x378] sm:$0xff] %v398
    %527 = vst [vmem:[#allocation2 + $0x380] sm:$0xff] %v399
    %528 = vst [vmem:[#allocation2 + $0x388] sm:$0xff] %v400
    %529 = vst [vmem:[#allocation2 + $0x390] sm:$0xff] %v401
    %530 = vst [vmem:[#allocation2 + $0x398] sm:$0xff] %v402
    %531 = vst [vmem:[#allocation2 + $0x3a0] sm:$0xff] %v403
    %532 = vst [vmem:[#allocation2 + $0x3a8] sm:$0xff] %v404
    %533 = vst [vmem:[#allocation2 + $0x3b0] sm:$0xff] %v405
    %534 = vst [vmem:[#allocation2 + $0x3b8] sm:$0xff] %v406
    %535 = vst [vmem:[#allocation2 + $0x3c0] sm:$0xff] %v407
    %536 = vst [vmem:[#allocation2 + $0x3c8] sm:$0xff] %v408
    %537 = vst [vmem:[#allocation2 + $0x3d0] sm:$0xff] %v409
    %538 = vst [vmem:[#allocation2 + $0x3d8] sm:$0xff] %v410
    %539 = vst [vmem:[#allocation2 + $0x3e0] sm:$0xff] %v411
    %540 = vst [vmem:[#allocation2 + $0x3e8] sm:$0xff] %v412
    %541 = vst [vmem:[#allocation2 + $0x3f0] sm:$0xff] %v413
    %542 = vst [vmem:[#allocation2 + $0x3f8] sm:$0xff] %v414
    %v543 = vld [vmem:[#allocation2] sm:$0xff]
    %v544 = vld [vmem:[#allocation2 + $0x8] sm:$0xff]
    %v545 = vld [vmem:[#allocation2 + $0x10] sm:$0xff]
    %v546 = vld [vmem:[#allocation2 + $0x18] sm:$0xff]
    %v547 = vld [vmem:[#allocation2 + $0x20] sm:$0xff]
    %v548 = vld [vmem:[#allocation2 + $0x28] sm:$0xff]
    %v549 = vld [vmem:[#allocation2 + $0x30] sm:$0xff]
    %v550 = vld [vmem:[#allocation2 + $0x38] sm:$0xff]
    %v551 = vld [vmem:[#allocation2 + $0x40] sm:$0xff]
    %v552 = vld [vmem:[#allocation2 + $0x48] sm:$0xff]
    %v553 = vld [vmem:[#allocation2 + $0x50] sm:$0xff]
    %v554 = vld [vmem:[#allocation2 + $0x58] sm:$0xff]
    %v555 = vld [vmem:[#allocation2 + $0x60] sm:$0xff]
    %v556 = vld [vmem:[#allocation2 + $0x68] sm:$0xff]
    %v557 = vld [vmem:[#allocation2 + $0x70] sm:$0xff]
    %v558 = vld [vmem:[#allocation2 + $0x78] sm:$0xff]
    %v559 = vld [vmem:[#allocation2 + $0x80] sm:$0xff]
    %v560 = vld [vmem:[#allocation2 + $0x88] sm:$0xff]
    %v561 = vld [vmem:[#allocation2 + $0x90] sm:$0xff]
    %v562 = vld [vmem:[#allocation2 + $0x98] sm:$0xff]
    %v563 = vld [vmem:[#allocation2 + $0xa0] sm:$0xff]
    %v564 = vld [vmem:[#allocation2 + $0xa8] sm:$0xff]
    %v565 = vld [vmem:[#allocation2 + $0xb0] sm:$0xff]
    %v566 = vld [vmem:[#allocation2 + $0xb8] sm:$0xff]
    %v567 = vld [vmem:[#allocation2 + $0xc0] sm:$0xff]
    %v568 = vld [vmem:[#allocation2 + $0xc8] sm:$0xff]
    %v569 = vld [vmem:[#allocation2 + $0xd0] sm:$0xff]
    %v570 = vld [vmem:[#allocation2 + $0xd8] sm:$0xff]
    %v571 = vld [vmem:[#allocation2 + $0xe0] sm:$0xff]
    %v572 = vld [vmem:[#allocation2 + $0xe8] sm:$0xff]
    %v573 = vld [vmem:[#allocation2 + $0xf0] sm:$0xff]
    %v574 = vld [vmem:[#allocation2 + $0xf8] sm:$0xff]
    %v575 = vld [vmem:[#allocation2 + $0x100] sm:$0xff]
    %v576 = vld [vmem:[#allocation2 + $0x108] sm:$0xff]
    %v577 = vld [vmem:[#allocation2 + $0x110] sm:$0xff]
    %v578 = vld [vmem:[#allocation2 + $0x118] sm:$0xff]
    %v579 = vld [vmem:[#allocation2 + $0x120] sm:$0xff]
    %v580 = vld [vmem:[#allocation2 + $0x128] sm:$0xff]
    %v581 = vld [vmem:[#allocation2 + $0x130] sm:$0xff]
    %v582 = vld [vmem:[#allocation2 + $0x138] sm:$0xff]
    %v583 = vld [vmem:[#allocation2 + $0x140] sm:$0xff]
    %v584 = vld [vmem:[#allocation2 + $0x148] sm:$0xff]
    %v585 = vld [vmem:[#allocation2 + $0x150] sm:$0xff]
    %v586 = vld [vmem:[#allocation2 + $0x158] sm:$0xff]
    %v587 = vld [vmem:[#allocation2 + $0x160] sm:$0xff]
    %v588 = vld [vmem:[#allocation2 + $0x168] sm:$0xff]
    %v589 = vld [vmem:[#allocation2 + $0x170] sm:$0xff]
    %v590 = vld [vmem:[#allocation2 + $0x178] sm:$0xff]
    %v591 = vld [vmem:[#allocation2 + $0x180] sm:$0xff]
    %v592 = vld [vmem:[#allocation2 + $0x188] sm:$0xff]
    %v593 = vld [vmem:[#allocation2 + $0x190] sm:$0xff]
    %v594 = vld [vmem:[#allocation2 + $0x198] sm:$0xff]
    %v595 = vld [vmem:[#allocation2 + $0x1a0] sm:$0xff]
    %v596 = vld [vmem:[#allocation2 + $0x1a8] sm:$0xff]
    %v597 = vld [vmem:[#allocation2 + $0x1b0] sm:$0xff]
    %v598 = vld [vmem:[#allocation2 + $0x1b8] sm:$0xff]
    %v599 = vld [vmem:[#allocation2 + $0x1c0] sm:$0xff]
    %v600 = vld [vmem:[#allocation2 + $0x1c8] sm:$0xff]
    %v601 = vld [vmem:[#allocation2 + $0x1d0] sm:$0xff]
    %v602 = vld [vmem:[#allocation2 + $0x1d8] sm:$0xff]
    %v603 = vld [vmem:[#allocation2 + $0x1e0] sm:$0xff]
    %v604 = vld [vmem:[#allocation2 + $0x1e8] sm:$0xff]
    %v605 = vld [vmem:[#allocation2 + $0x1f0] sm:$0xff]
    %v606 = vld [vmem:[#allocation2 + $0x1f8] sm:$0xff]
    %v607 = vld [vmem:[#allocation2 + $0x200] sm:$0xff]
    %v608 = vld [vmem:[#allocation2 + $0x208] sm:$0xff]
    %v609 = vld [vmem:[#allocation2 + $0x210] sm:$0xff]
    %v610 = vld [vmem:[#allocation2 + $0x218] sm:$0xff]
    %v611 = vld [vmem:[#allocation2 + $0x220] sm:$0xff]
    %v612 = vld [vmem:[#allocation2 + $0x228] sm:$0xff]
    %v613 = vld [vmem:[#allocation2 + $0x230] sm:$0xff]
    %v614 = vld [vmem:[#allocation2 + $0x238] sm:$0xff]
    %v615 = vld [vmem:[#allocation2 + $0x240] sm:$0xff]
    %v616 = vld [vmem:[#allocation2 + $0x248] sm:$0xff]
    %v617 = vld [vmem:[#allocation2 + $0x250] sm:$0xff]
    %v618 = vld [vmem:[#allocation2 + $0x258] sm:$0xff]
    %v619 = vld [vmem:[#allocation2 + $0x260] sm:$0xff]
    %v620 = vld [vmem:[#allocation2 + $0x268] sm:$0xff]
    %v621 = vld [vmem:[#allocation2 + $0x270] sm:$0xff]
    %v622 = vld [vmem:[#allocation2 + $0x278] sm:$0xff]
    %v623 = vld [vmem:[#allocation2 + $0x280] sm:$0xff]
    %v624 = vld [vmem:[#allocation2 + $0x288] sm:$0xff]
    %v625 = vld [vmem:[#allocation2 + $0x290] sm:$0xff]
    %v626 = vld [vmem:[#allocation2 + $0x298] sm:$0xff]
    %v627 = vld [vmem:[#allocation2 + $0x2a0] sm:$0xff]
    %v628 = vld [vmem:[#allocation2 + $0x2a8] sm:$0xff]
    %v629 = vld [vmem:[#allocation2 + $0x2b0] sm:$0xff]
    %v630 = vld [vmem:[#allocation2 + $0x2b8] sm:$0xff]
    %v631 = vld [vmem:[#allocation2 + $0x2c0] sm:$0xff]
    %v632 = vld [vmem:[#allocation2 + $0x2c8] sm:$0xff]
    %v633 = vld [vmem:[#allocation2 + $0x2d0] sm:$0xff]
    %v634 = vld [vmem:[#allocation2 + $0x2d8] sm:$0xff]
    %v635 = vld [vmem:[#allocation2 + $0x2e0] sm:$0xff]
    %v636 = vld [vmem:[#allocation2 + $0x2e8] sm:$0xff]
    %v637 = vld [vmem:[#allocation2 + $0x2f0] sm:$0xff]
    %v638 = vld [vmem:[#allocation2 + $0x2f8] sm:$0xff]
    %v639 = vld [vmem:[#allocation2 + $0x300] sm:$0xff]
    %v640 = vld [vmem:[#allocation2 + $0x308] sm:$0xff]
    %v641 = vld [vmem:[#allocation2 + $0x310] sm:$0xff]
    %v642 = vld [vmem:[#allocation2 + $0x318] sm:$0xff]
    %v643 = vld [vmem:[#allocation2 + $0x320] sm:$0xff]
    %v644 = vld [vmem:[#allocation2 + $0x328] sm:$0xff]
    %v645 = vld [vmem:[#allocation2 + $0x330] sm:$0xff]
    %v646 = vld [vmem:[#allocation2 + $0x338] sm:$0xff]
    %v647 = vld [vmem:[#allocation2 + $0x340] sm:$0xff]
    %v648 = vld [vmem:[#allocation2 + $0x348] sm:$0xff]
    %v649 = vld [vmem:[#allocation2 + $0x350] sm:$0xff]
    %v650 = vld [vmem:[#allocation2 + $0x358] sm:$0xff]
    %v651 = vld [vmem:[#allocation2 + $0x360] sm:$0xff]
    %v652 = vld [vmem:[#allocation2 + $0x368] sm:$0xff]
    %v653 = vld [vmem:[#allocation2 + $0x370] sm:$0xff]
    %v654 = vld [vmem:[#allocation2 + $0x378] sm:$0xff]
    %v655 = vld [vmem:[#allocation2 + $0x380] sm:$0xff]
    %v656 = vld [vmem:[#allocation2 + $0x388] sm:$0xff]
    %v657 = vld [vmem:[#allocation2 + $0x390] sm:$0xff]
    %v658 = vld [vmem:[#allocation2 + $0x398] sm:$0xff]
    %v659 = vld [vmem:[#allocation2 + $0x3a0] sm:$0xff]
    %v660 = vld [vmem:[#allocation2 + $0x3a8] sm:$0xff]
    %v661 = vld [vmem:[#allocation2 + $0x3b0] sm:$0xff]
    %v662 = vld [vmem:[#allocation2 + $0x3b8] sm:$0xff]
    %v663 = vld [vmem:[#allocation2 + $0x3c0] sm:$0xff]
    %v664 = vld [vmem:[#allocation2 + $0x3c8] sm:$0xff]
    %v665 = vld [vmem:[#allocation2 + $0x3d0] sm:$0xff]
    %v666 = vld [vmem:[#allocation2 + $0x3d8] sm:$0xff]
    %v667 = vld [vmem:[#allocation2 + $0x3e0] sm:$0xff]
    %v668 = vld [vmem:[#allocation2 + $0x3e8] sm:$0xff]
    %v669 = vld [vmem:[#allocation2 + $0x3f0] sm:$0xff]
    %v670 = vld [vmem:[#allocation2 + $0x3f8] sm:$0xff]
    %v671 = vld [vmem:[#allocation3] sm:$0xff]
    %v672 = vld [vmem:[#allocation3 + $0x8] sm:$0xff]
    %v673 = vld [vmem:[#allocation3 + $0x10] sm:$0xff]
    %v674 = vld [vmem:[#allocation3 + $0x18] sm:$0xff]
    %v675 = vld [vmem:[#allocation3 + $0x20] sm:$0xff]
    %v676 = vld [vmem:[#allocation3 + $0x28] sm:$0xff]
    %v677 = vld [vmem:[#allocation3 + $0x30] sm:$0xff]
    %v678 = vld [vmem:[#allocation3 + $0x38] sm:$0xff]
    %v679 = vld [vmem:[#allocation3 + $0x40] sm:$0xff]
    %v680 = vld [vmem:[#allocation3 + $0x48] sm:$0xff]
    %v681 = vld [vmem:[#allocation3 + $0x50] sm:$0xff]
    %v682 = vld [vmem:[#allocation3 + $0x58] sm:$0xff]
    %v683 = vld [vmem:[#allocation3 + $0x60] sm:$0xff]
    %v684 = vld [vmem:[#allocation3 + $0x68] sm:$0xff]
    %v685 = vld [vmem:[#allocation3 + $0x70] sm:$0xff]
    %v686 = vld [vmem:[#allocation3 + $0x78] sm:$0xff]
    %v687 = vld [vmem:[#allocation3 + $0x80] sm:$0xff]
    %v688 = vld [vmem:[#allocation3 + $0x88] sm:$0xff]
    %v689 = vld [vmem:[#allocation3 + $0x90] sm:$0xff]
    %v690 = vld [vmem:[#allocation3 + $0x98] sm:$0xff]
    %v691 = vld [vmem:[#allocation3 + $0xa0] sm:$0xff]
    %v692 = vld [vmem:[#allocation3 + $0xa8] sm:$0xff]
    %v693 = vld [vmem:[#allocation3 + $0xb0] sm:$0xff]
    %v694 = vld [vmem:[#allocation3 + $0xb8] sm:$0xff]
    %v695 = vld [vmem:[#allocation3 + $0xc0] sm:$0xff]
    %v696 = vld [vmem:[#allocation3 + $0xc8] sm:$0xff]
    %v697 = vld [vmem:[#allocation3 + $0xd0] sm:$0xff]
    %v698 = vld [vmem:[#allocation3 + $0xd8] sm:$0xff]
    %v699 = vld [vmem:[#allocation3 + $0xe0] sm:$0xff]
    %v700 = vld [vmem:[#allocation3 + $0xe8] sm:$0xff]
    %v701 = vld [vmem:[#allocation3 + $0xf0] sm:$0xff]
    %v702 = vld [vmem:[#allocation3 + $0xf8] sm:$0xff]
    %v703 = vld [vmem:[#allocation3 + $0x100] sm:$0xff]
    %v704 = vld [vmem:[#allocation3 + $0x108] sm:$0xff]
    %v705 = vld [vmem:[#allocation3 + $0x110] sm:$0xff]
    %v706 = vld [vmem:[#allocation3 + $0x118] sm:$0xff]
    %v707 = vld [vmem:[#allocation3 + $0x120] sm:$0xff]
    %v708 = vld [vmem:[#allocation3 + $0x128] sm:$0xff]
    %v709 = vld [vmem:[#allocation3 + $0x130] sm:$0xff]
    %v710 = vld [vmem:[#allocation3 + $0x138] sm:$0xff]
    %v711 = vld [vmem:[#allocation3 + $0x140] sm:$0xff]
    %v712 = vld [vmem:[#allocation3 + $0x148] sm:$0xff]
    %v713 = vld [vmem:[#allocation3 + $0x150] sm:$0xff]
    %v714 = vld [vmem:[#allocation3 + $0x158] sm:$0xff]
    %v715 = vld [vmem:[#allocation3 + $0x160] sm:$0xff]
    %v716 = vld [vmem:[#allocation3 + $0x168] sm:$0xff]
    %v717 = vld [vmem:[#allocation3 + $0x170] sm:$0xff]
    %v718 = vld [vmem:[#allocation3 + $0x178] sm:$0xff]
    %v719 = vld [vmem:[#allocation3 + $0x180] sm:$0xff]
    %v720 = vld [vmem:[#allocation3 + $0x188] sm:$0xff]
    %v721 = vld [vmem:[#allocation3 + $0x190] sm:$0xff]
    %v722 = vld [vmem:[#allocation3 + $0x198] sm:$0xff]
    %v723 = vld [vmem:[#allocation3 + $0x1a0] sm:$0xff]
    %v724 = vld [vmem:[#allocation3 + $0x1a8] sm:$0xff]
    %v725 = vld [vmem:[#allocation3 + $0x1b0] sm:$0xff]
    %v726 = vld [vmem:[#allocation3 + $0x1b8] sm:$0xff]
    %v727 = vld [vmem:[#allocation3 + $0x1c0] sm:$0xff]
    %v728 = vld [vmem:[#allocation3 + $0x1c8] sm:$0xff]
    %v729 = vld [vmem:[#allocation3 + $0x1d0] sm:$0xff]
    %v730 = vld [vmem:[#allocation3 + $0x1d8] sm:$0xff]
    %v731 = vld [vmem:[#allocation3 + $0x1e0] sm:$0xff]
    %v732 = vld [vmem:[#allocation3 + $0x1e8] sm:$0xff]
    %v733 = vld [vmem:[#allocation3 + $0x1f0] sm:$0xff]
    %v734 = vld [vmem:[#allocation3 + $0x1f8] sm:$0xff]
    %735 = vmatprep.subr.mxu0 0.0
    %736 = vmatpush1.msra.mxu0 %v671
    %737 = vmatprep.subr.mxu0 0.0
    %738 = vmatpush1.msra.mxu0 %v672
    %739 = vmatprep.subr.mxu0 0.0
    %740 = vmatpush1.msra.mxu0 %v673
    %741 = vmatprep.subr.mxu0 0.0
    %742 = vmatpush1.msra.mxu0 %v674
    %743 = vmatprep.subr.mxu0 0.0
    %744 = vmatpush1.msra.mxu0 %v675
    %745 = vmatprep.subr.mxu0 0.0
    %746 = vmatpush1.msra.mxu0 %v676
    %747 = vmatprep.subr.mxu0 0.0
    %748 = vmatpush1.msra.mxu0 %v677
    %749 = vmatprep.subr.mxu0 0.0
    %750 = vmatpush1.msra.mxu0 %v678
    %751 = vmatprep.subr.mxu0 0.0
    %752 = vmatpush1.msra.mxu0 %v679
    %753 = vmatprep.subr.mxu0 0.0
    %754 = vmatpush1.msra.mxu0 %v680
    %755 = vmatprep.subr.mxu0 0.0
    %756 = vmatpush1.msra.mxu0 %v681
    %757 = vmatprep.subr.mxu0 0.0
    %758 = vmatpush1.msra.mxu0 %v682
    %759 = vmatprep.subr.mxu0 0.0
    %760 = vmatpush1.msra.mxu0 %v683
    %761 = vmatprep.subr.mxu0 0.0
    %762 = vmatpush1.msra.mxu0 %v684
    %763 = vmatprep.subr.mxu0 0.0
    %764 = vmatpush1.msra.mxu0 %v685
    %765 = vmatprep.subr.mxu0 0.0
    %766 = vmatpush1.msra.mxu0 %v686
    %767 = vmatprep.subr.mxu0 0.0
    %768 = vmatpush1.msra.mxu0 %v687
    %769 = vmatprep.subr.mxu0 0.0
    %770 = vmatpush1.msra.mxu0 %v688
    %771 = vmatprep.subr.mxu0 0.0
    %772 = vmatpush1.msra.mxu0 %v689
    %773 = vmatprep.subr.mxu0 0.0
    %774 = vmatpush1.msra.mxu0 %v690
    %775 = vmatprep.subr.mxu0 0.0
    %776 = vmatpush1.msra.mxu0 %v691
    %777 = vmatprep.subr.mxu0 0.0
    %778 = vmatpush1.msra.mxu0 %v692
    %779 = vmatprep.subr.mxu0 0.0
    %780 = vmatpush1.msra.mxu0 %v693
    %781 = vmatprep.subr.mxu0 0.0
    %782 = vmatpush1.msra.mxu0 %v694
    %783 = vmatprep.subr.mxu0 0.0
    %784 = vmatpush1.msra.mxu0 %v695
    %785 = vmatprep.subr.mxu0 0.0
    %786 = vmatpush1.msra.mxu0 %v696
    %787 = vmatprep.subr.mxu0 0.0
    %788 = vmatpush1.msra.mxu0 %v697
    %789 = vmatprep.subr.mxu0 0.0
    %790 = vmatpush1.msra.mxu0 %v698
    %791 = vmatprep.subr.mxu0 0.0
    %792 = vmatpush1.msra.mxu0 %v699
    %793 = vmatprep.subr.mxu0 0.0
    %794 = vmatpush1.msra.mxu0 %v700
    %795 = vmatprep.subr.mxu0 0.0
    %796 = vmatpush1.msra.mxu0 %v701
    %797 = vmatprep.subr.mxu0 0.0
    %798 = vmatpush1.msra.mxu0 %v702
    %799 = vmatprep.mubr.f32.mxu0 %v544
    %800 = vmatmul.mubr.f32.gmra.mrb[0].mxu0 %v543
    %v801 = vpop.f32.mrb[0].mxu0
    %v802 = vadd.f32 0.0, %v801
    %v803 = vpop.f32.mrb[0].mxu0
    %804 = vmatprep.mubr.f32.mxu0 %v548
    %805 = vmatmul.mubr.f32.gmra.mrb[0].mxu0 %v547
    %v806 = vpop.f32.mrb[0].mxu0
    %v807 = vadd.f32 0.0, %v806
    %v808 = vpop.f32.mrb[0].mxu0
    %809 = vmatprep.mubr.f32.mxu0 %v552
    %810 = vmatmul.mubr.f32.gmra.mrb[0].mxu0 %v551
    %v811 = vpop.f32.mrb[0].mxu0
    %v812 = vadd.f32 0.0, %v811
    %v813 = vpop.f32.mrb[0].mxu0
    %814 = vmatprep.mubr.f32.mxu0 %v556
    %815 = vmatmul.mubr.f32.gmra.mrb[0].mxu0 %v555
    %v816 = vpop.f32.mrb[0].mxu0
    %v817 = vadd.f32 0.0, %v816
    %v818 = vpop.f32.mrb[0].mxu0
    %819 = vmatprep.mubr.f32.mxu0 %v560
    %820 = vmatmul.mubr.f32.gmra.mrb[0].mxu0 %v559
    %v821 = vpop.f32.mrb[0].mxu0
    %v822 = vadd.f32 0.0, %v821
    %v823 = vpop.f32.mrb[0].mxu0
    %824 = vmatprep.mubr.f32.mxu0 %v564
    %825 = vmatmul.mubr.f32.gmra.mrb[0].mxu0 %v563
    %v826 = vpop.f32.mrb[0].mxu0
    %v827 = vadd.f32 0.0, %v826
    %v828 = vpop.f32.mrb[0].mxu0
    %829 = vmatprep.mubr.f32.mxu0 %v568
    %830 = vmatmul.mubr.f32.gmra.mrb[0].mxu0 %v567
    %v831 = vpop.f32.mrb[0].mxu0
    %v832 = vadd.f32 0.0, %v831
    %v833 = vpop.f32.mrb[0].mxu0
    %834 = vmatprep.mubr.f32.mxu0 %v572
    %835 = vmatmul.mubr.f32.gmra.mrb[0].mxu0 %v571
    %v836 = vpop.f32.mrb[0].mxu0
    %v837 = vadd.f32 0.0, %v836
    %v838 = vpop.f32.mrb[0].mxu0
    %839 = vmatprep.mubr.f32.mxu0 %v576
    %840 = vmatmul.mubr.f32.gmra.mrb[0].mxu0 %v575
    %v841 = vpop.f32.mrb[0].mxu0
    %v842 = vadd.f32 0.0, %v841
    %v843 = vpop.f32.mrb[0].mxu0
    %844 = vmatprep.mubr.f32.mxu0 %v580
    %845 = vmatmul.mubr.f32.gmra.mrb[0].mxu0 %v579
    %v846 = vpop.f32.mrb[0].mxu0
    %v847 = vadd.f32 0.0, %v846
    %v848 = vpop.f32.mrb[0].mxu0
    %849 = vmatprep.mubr.f32.mxu0 %v584
    %850 = vmatmul.mubr.f32.gmra.mrb[0].mxu0 %v583
    %v851 = vpop.f32.mrb[0].mxu0
    %v852 = vadd.f32 0.0, %v851
    %v853 = vpop.f32.mrb[0].mxu0
    %854 = vmatprep.mubr.f32.mxu0 %v588
    %855 = vmatmul.mubr.f32.gmra.mrb[0].mxu0 %v587
    %v856 = vpop.f32.mrb[0].mxu0
    %v857 = vadd.f32 0.0, %v856
    %v858 = vpop.f32.mrb[0].mxu0
    %859 = vmatprep.mubr.f32.mxu0 %v592
    %860 = vmatmul.mubr.f32.gmra.mrb[0].mxu0 %v591
    %v861 = vpop.f32.mrb[0].mxu0
    %v862 = vadd.f32 0.0, %v861
    %v863 = vpop.f32.mrb[0].mxu0
    %864 = vmatprep.mubr.f32.mxu0 %v596
    %865 = vmatmul.mubr.f32.gmra.mrb[0].mxu0 %v595
    %v866 = vpop.f32.mrb[0].mxu0
    %v867 = vadd.f32 0.0, %v866
    %v868 = vpop.f32.mrb[0].mxu0
    %869 = vmatprep.mubr.f32.mxu0 %v600
    %870 = vmatmul.mubr.f32.gmra.mrb[0].mxu0 %v599
    %v871 = vpop.f32.mrb[0].mxu0
    %v872 = vadd.f32 0.0, %v871
    %v873 = vpop.f32.mrb[0].mxu0
    %874 = vmatprep.mubr.f32.mxu0 %v604
    %875 = vmatmul.mubr.f32.gmra.mrb[0].mxu0 %v603
    %v876 = vpop.f32.mrb[0].mxu0
    %v877 = vadd.f32 0.0, %v876
    %v878 = vpop.f32.mrb[0].mxu0
    %879 = vmatprep.mubr.f32.mxu0 %v608
    %880 = vmatmul.mubr.f32.gmra.mrb[0].mxu0 %v607
    %v881 = vpop.f32.mrb[0].mxu0
    %v882 = vadd.f32 0.0, %v881
    %v883 = vpop.f32.mrb[0].mxu0
    %884 = vmatprep.mubr.f32.mxu0 %v612
    %885 = vmatmul.mubr.f32.gmra.mrb[0].mxu0 %v611
    %v886 = vpop.f32.mrb[0].mxu0
    %v887 = vadd.f32 0.0, %v886
    %v888 = vpop.f32.mrb[0].mxu0
    %889 = vmatprep.mubr.f32.mxu0 %v616
    %890 = vmatmul.mubr.f32.gmra.mrb[0].mxu0 %v615
    %v891 = vpop.f32.mrb[0].mxu0
    %v892 = vadd.f32 0.0, %v891
    %v893 = vpop.f32.mrb[0].mxu0
    %894 = vmatprep.mubr.f32.mxu0 %v620
    %895 = vmatmul.mubr.f32.gmra.mrb[0].mxu0 %v619
    %v896 = vpop.f32.mrb[0].mxu0
    %v897 = vadd.f32 0.0, %v896
    %v898 = vpop.f32.mrb[0].mxu0
    %899 = vmatprep.mubr.f32.mxu0 %v624
    %900 = vmatmul.mubr.f32.gmra.mrb[0].mxu0 %v623
    %v901 = vpop.f32.mrb[0].mxu0
    %v902 = vadd.f32 0.0, %v901
    %v903 = vpop.f32.mrb[0].mxu0
    %904 = vmatprep.mubr.f32.mxu0 %v628
    %905 = vmatmul.mubr.f32.gmra.mrb[0].mxu0 %v627
    %v906 = vpop.f32.mrb[0].mxu0
    %v907 = vadd.f32 0.0, %v906
    %v908 = vpop.f32.mrb[0].mxu0
    %909 = vmatprep.mubr.f32.mxu0 %v632
    %910 = vmatmul.mubr.f32.gmra.mrb[0].mxu0 %v631
    %v911 = vpop.f32.mrb[0].mxu0
    %v912 = vadd.f32 0.0, %v911
    %v913 = vpop.f32.mrb[0].mxu0
    %914 = vmatprep.mubr.f32.mxu0 %v636
    %915 = vmatmul.mubr.f32.gmra.mrb[0].mxu0 %v635
    %v916 = vpop.f32.mrb[0].mxu0
    %v917 = vadd.f32 0.0, %v916
    %v918 = vpop.f32.mrb[0].mxu0
    %919 = vmatprep.mubr.f32.mxu0 %v640
    %920 = vmatmul.mubr.f32.gmra.mrb[0].mxu0 %v639
    %v921 = vpop.f32.mrb[0].mxu0
    %v922 = vadd.f32 0.0, %v921
    %v923 = vpop.f32.mrb[0].mxu0
    %924 = vmatprep.mubr.f32.mxu0 %v644
    %925 = vmatmul.mubr.f32.gmra.mrb[0].mxu0 %v643
    %v926 = vpop.f32.mrb[0].mxu0
    %v927 = vadd.f32 0.0, %v926
    %v928 = vpop.f32.mrb[0].mxu0
    %929 = vmatprep.mubr.f32.mxu0 %v648
    %930 = vmatmul.mubr.f32.gmra.mrb[0].mxu0 %v647
    %v931 = vpop.f32.mrb[0].mxu0
    %v932 = vadd.f32 0.0, %v931
    %v933 = vpop.f32.mrb[0].mxu0
    %934 = vmatprep.mubr.f32.mxu0 %v652
    %935 = vmatmul.mubr.f32.gmra.mrb[0].mxu0 %v651
    %v936 = vpop.f32.mrb[0].mxu0
    %v937 = vadd.f32 0.0, %v936
    %v938 = vpop.f32.mrb[0].mxu0
    %939 = vmatprep.mubr.f32.mxu0 %v656
    %940 = vmatmul.mubr.f32.gmra.mrb[0].mxu0 %v655
    %v941 = vpop.f32.mrb[0].mxu0
    %v942 = vadd.f32 0.0, %v941
    %v943 = vpop.f32.mrb[0].mxu0
    %944 = vmatprep.mubr.f32.mxu0 %v660
    %945 = vmatmul.mubr.f32.gmra.mrb[0].mxu0 %v659
    %v946 = vpop.f32.mrb[0].mxu0
    %v947 = vadd.f32 0.0, %v946
    %v948 = vpop.f32.mrb[0].mxu0
    %949 = vmatprep.mubr.f32.mxu0 %v664
    %950 = vmatmul.mubr.f32.gmra.mrb[0].mxu0 %v663
    %v951 = vpop.f32.mrb[0].mxu0
    %v952 = vadd.f32 0.0, %v951
    %v953 = vpop.f32.mrb[0].mxu0
    %954 = vmatprep.mubr.f32.mxu0 %v668
    %955 = vmatmul.mubr.f32.gmra.mrb[0].mxu0 %v667
    %v956 = vpop.f32.mrb[0].mxu0
    %v957 = vadd.f32 0.0, %v956
    %v958 = vpop.f32.mrb[0].mxu0
    %959 = vdwg.mxu0
    %960 = vmatprep.subr.mxu0 0.0
    %961 = vmatpush1.msra.mxu0 %v703
    %962 = vmatprep.subr.mxu0 0.0
    %963 = vmatpush1.msra.mxu0 %v704
    %964 = vmatprep.subr.mxu0 0.0
    %965 = vmatpush1.msra.mxu0 %v705
    %966 = vmatprep.subr.mxu0 0.0
    %967 = vmatpush1.msra.mxu0 %v706
    %968 = vmatprep.subr.mxu0 0.0
    %969 = vmatpush1.msra.mxu0 %v707
    %970 = vmatprep.subr.mxu0 0.0
    %971 = vmatpush1.msra.mxu0 %v708
    %972 = vmatprep.subr.mxu0 0.0
    %973 = vmatpush1.msra.mxu0 %v709
    %974 = vmatprep.subr.mxu0 0.0
    %975 = vmatpush1.msra.mxu0 %v710
    %976 = vmatprep.subr.mxu0 0.0
    %977 = vmatpush1.msra.mxu0 %v711
    %978 = vmatprep.subr.mxu0 0.0
    %979 = vmatpush1.msra.mxu0 %v712
    %980 = vmatprep.subr.mxu0 0.0
    %981 = vmatpush1.msra.mxu0 %v713
    %982 = vmatprep.subr.mxu0 0.0
    %983 = vmatpush1.msra.mxu0 %v714
    %984 = vmatprep.subr.mxu0 0.0
    %985 = vmatpush1.msra.mxu0 %v715
    %986 = vmatprep.subr.mxu0 0.0
    %987 = vmatpush1.msra.mxu0 %v716
    %988 = vmatprep.subr.mxu0 0.0
    %989 = vmatpush1.msra.mxu0 %v717
    %990 = vmatprep.subr.mxu0 0.0
    %991 = vmatpush1.msra.mxu0 %v718
    %992 = vmatprep.subr.mxu0 0.0
    %993 = vmatpush1.msra.mxu0 %v719
    %994 = vmatprep.subr.mxu0 0.0
    %995 = vmatpush1.msra.mxu0 %v720
    %996 = vmatprep.subr.mxu0 0.0
    %997 = vmatpush1.msra.mxu0 %v721
    %998 = vmatprep.subr.mxu0 0.0
    %999 = vmatpush1.msra.mxu0 %v722
    %1000 = vmatprep.subr.mxu0 0.0
    %1001 = vmatpush1.msra.mxu0 %v723
    %1002 = vmatprep.subr.mxu0 0.0
    %1003 = vmatpush1.msra.mxu0 %v724
    %1004 = vmatprep.subr.mxu0 0.0
    %1005 = vmatpush1.msra.mxu0 %v725
    %1006 = vmatprep.subr.mxu0 0.0
    %1007 = vmatpush1.msra.mxu0 %v726
    %1008 = vmatprep.subr.mxu0 0.0
    %1009 = vmatpush1.msra.mxu0 %v727
    %1010 = vmatprep.subr.mxu0 0.0
    %1011 = vmatpush1.msra.mxu0 %v728
    %1012 = vmatprep.subr.mxu0 0.0
    %1013 = vmatpush1.msra.mxu0 %v729
    %1014 = vmatprep.subr.mxu0 0.0
    %1015 = vmatpush1.msra.mxu0 %v730
    %1016 = vmatprep.subr.mxu0 0.0
    %1017 = vmatpush1.msra.mxu0 %v731
    %1018 = vmatprep.subr.mxu0 0.0
    %1019 = vmatpush1.msra.mxu0 %v732
    %1020 = vmatprep.subr.mxu0 0.0
    %1021 = vmatpush1.msra.mxu0 %v733
    %1022 = vmatprep.subr.mxu0 0.0
    %1023 = vmatpush1.msra.mxu0 %v734
    %1024 = vmatprep.mubr.f32.mxu0 %v546
    %1025 = vmatmul.mubr.f32.gmra.mrb[0].mxu0 %v545
    %v1026 = vpop.f32.mrb[0].mxu0
    %v1027 = vadd.f32 %v802, %v1026
    %v1028 = vpop.f32.mrb[0].mxu0
    %1029 = vmatprep.mubr.f32.mxu0 %v550
    %1030 = vmatmul.mubr.f32.gmra.mrb[0].mxu0 %v549
    %v1031 = vpop.f32.mrb[0].mxu0
    %v1032 = vadd.f32 %v807, %v1031
    %v1033 = vpop.f32.mrb[0].mxu0
    %1034 = vmatprep.mubr.f32.mxu0 %v554
    %1035 = vmatmul.mubr.f32.gmra.mrb[0].mxu0 %v553
    %v1036 = vpop.f32.mrb[0].mxu0
    %v1037 = vadd.f32 %v812, %v1036
    %v1038 = vpop.f32.mrb[0].mxu0
    %1039 = vmatprep.mubr.f32.mxu0 %v558
    %1040 = vmatmul.mubr.f32.gmra.mrb[0].mxu0 %v557
    %v1041 = vpop.f32.mrb[0].mxu0
    %v1042 = vadd.f32 %v817, %v1041
    %v1043 = vpop.f32.mrb[0].mxu0
    %1044 = vmatprep.mubr.f32.mxu0 %v562
    %1045 = vmatmul.mubr.f32.gmra.mrb[0].mxu0 %v561
    %v1046 = vpop.f32.mrb[0].mxu0
    %v1047 = vadd.f32 %v822, %v1046
    %v1048 = vpop.f32.mrb[0].mxu0
    %1049 = vmatprep.mubr.f32.mxu0 %v566
    %1050 = vmatmul.mubr.f32.gmra.mrb[0].mxu0 %v565
    %v1051 = vpop.f32.mrb[0].mxu0
    %v1052 = vadd.f32 %v827, %v1051
    %v1053 = vpop.f32.mrb[0].mxu0
    %1054 = vmatprep.mubr.f32.mxu0 %v570
    %1055 = vmatmul.mubr.f32.gmra.mrb[0].mxu0 %v569
    %v1056 = vpop.f32.mrb[0].mxu0
    %v1057 = vadd.f32 %v832, %v1056
    %v1058 = vpop.f32.mrb[0].mxu0
    %1059 = vmatprep.mubr.f32.mxu0 %v574
    %1060 = vmatmul.mubr.f32.gmra.mrb[0].mxu0 %v573
    %v1061 = vpop.f32.mrb[0].mxu0
    %v1062 = vadd.f32 %v837, %v1061
    %v1063 = vpop.f32.mrb[0].mxu0
    %1064 = vmatprep.mubr.f32.mxu0 %v578
    %1065 = vmatmul.mubr.f32.gmra.mrb[0].mxu0 %v577
    %v1066 = vpop.f32.mrb[0].mxu0
    %v1067 = vadd.f32 %v842, %v1066
    %v1068 = vpop.f32.mrb[0].mxu0
    %1069 = vmatprep.mubr.f32.mxu0 %v582
    %1070 = vmatmul.mubr.f32.gmra.mrb[0].mxu0 %v581
    %v1071 = vpop.f32.mrb[0].mxu0
    %v1072 = vadd.f32 %v847, %v1071
    %v1073 = vpop.f32.mrb[0].mxu0
    %1074 = vmatprep.mubr.f32.mxu0 %v586
    %1075 = vmatmul.mubr.f32.gmra.mrb[0].mxu0 %v585
    %v1076 = vpop.f32.mrb[0].mxu0
    %v1077 = vadd.f32 %v852, %v1076
    %v1078 = vpop.f32.mrb[0].mxu0
    %1079 = vmatprep.mubr.f32.mxu0 %v590
    %1080 = vmatmul.mubr.f32.gmra.mrb[0].mxu0 %v589
    %v1081 = vpop.f32.mrb[0].mxu0
    %v1082 = vadd.f32 %v857, %v1081
    %v1083 = vpop.f32.mrb[0].mxu0
    %1084 = vmatprep.mubr.f32.mxu0 %v594
    %1085 = vmatmul.mubr.f32.gmra.mrb[0].mxu0 %v593
    %v1086 = vpop.f32.mrb[0].mxu0
    %v1087 = vadd.f32 %v862, %v1086
    %v1088 = vpop.f32.mrb[0].mxu0
    %1089 = vmatprep.mubr.f32.mxu0 %v598
    %1090 = vmatmul.mubr.f32.gmra.mrb[0].mxu0 %v597
    %v1091 = vpop.f32.mrb[0].mxu0
    %v1092 = vadd.f32 %v867, %v1091
    %v1093 = vpop.f32.mrb[0].mxu0
    %1094 = vmatprep.mubr.f32.mxu0 %v602
    %1095 = vmatmul.mubr.f32.gmra.mrb[0].mxu0 %v601
    %v1096 = vpop.f32.mrb[0].mxu0
    %v1097 = vadd.f32 %v872, %v1096
    %v1098 = vpop.f32.mrb[0].mxu0
    %1099 = vmatprep.mubr.f32.mxu0 %v606
    %1100 = vmatmul.mubr.f32.gmra.mrb[0].mxu0 %v605
    %v1101 = vpop.f32.mrb[0].mxu0
    %v1102 = vadd.f32 %v877, %v1101
    %v1103 = vpop.f32.mrb[0].mxu0
    %1104 = vmatprep.mubr.f32.mxu0 %v610
    %1105 = vmatmul.mubr.f32.gmra.mrb[0].mxu0 %v609
    %v1106 = vpop.f32.mrb[0].mxu0
    %v1107 = vadd.f32 %v882, %v1106
    %v1108 = vpop.f32.mrb[0].mxu0
    %1109 = vmatprep.mubr.f32.mxu0 %v614
    %1110 = vmatmul.mubr.f32.gmra.mrb[0].mxu0 %v613
    %v1111 = vpop.f32.mrb[0].mxu0
    %v1112 = vadd.f32 %v887, %v1111
    %v1113 = vpop.f32.mrb[0].mxu0
    %1114 = vmatprep.mubr.f32.mxu0 %v618
    %1115 = vmatmul.mubr.f32.gmra.mrb[0].mxu0 %v617
    %v1116 = vpop.f32.mrb[0].mxu0
    %v1117 = vadd.f32 %v892, %v1116
    %v1118 = vpop.f32.mrb[0].mxu0
    %1119 = vmatprep.mubr.f32.mxu0 %v622
    %1120 = vmatmul.mubr.f32.gmra.mrb[0].mxu0 %v621
    %v1121 = vpop.f32.mrb[0].mxu0
    %v1122 = vadd.f32 %v897, %v1121
    %v1123 = vpop.f32.mrb[0].mxu0
    %1124 = vmatprep.mubr.f32.mxu0 %v626
    %1125 = vmatmul.mubr.f32.gmra.mrb[0].mxu0 %v625
    %v1126 = vpop.f32.mrb[0].mxu0
    %v1127 = vadd.f32 %v902, %v1126
    %v1128 = vpop.f32.mrb[0].mxu0
    %1129 = vmatprep.mubr.f32.mxu0 %v630
    %1130 = vmatmul.mubr.f32.gmra.mrb[0].mxu0 %v629
    %v1131 = vpop.f32.mrb[0].mxu0
    %v1132 = vadd.f32 %v907, %v1131
    %v1133 = vpop.f32.mrb[0].mxu0
    %1134 = vmatprep.mubr.f32.mxu0 %v634
    %1135 = vmatmul.mubr.f32.gmra.mrb[0].mxu0 %v633
    %v1136 = vpop.f32.mrb[0].mxu0
    %v1137 = vadd.f32 %v912, %v1136
    %v1138 = vpop.f32.mrb[0].mxu0
    %1139 = vmatprep.mubr.f32.mxu0 %v638
    %1140 = vmatmul.mubr.f32.gmra.mrb[0].mxu0 %v637
    %v1141 = vpop.f32.mrb[0].mxu0
    %v1142 = vadd.f32 %v917, %v1141
    %v1143 = vpop.f32.mrb[0].mxu0
    %1144 = vmatprep.mubr.f32.mxu0 %v642
    %1145 = vmatmul.mubr.f32.gmra.mrb[0].mxu0 %v641
    %v1146 = vpop.f32.mrb[0].mxu0
    %v1147 = vadd.f32 %v922, %v1146
    %v1148 = vpop.f32.mrb[0].mxu0
    %1149 = vmatprep.mubr.f32.mxu0 %v646
    %1150 = vmatmul.mubr.f32.gmra.mrb[0].mxu0 %v645
    %v1151 = vpop.f32.mrb[0].mxu0
    %v1152 = vadd.f32 %v927, %v1151
    %v1153 = vpop.f32.mrb[0].mxu0
    %1154 = vmatprep.mubr.f32.mxu0 %v650
    %1155 = vmatmul.mubr.f32.gmra.mrb[0].mxu0 %v649
    %v1156 = vpop.f32.mrb[0].mxu0
    %v1157 = vadd.f32 %v932, %v1156
    %v1158 = vpop.f32.mrb[0].mxu0
    %1159 = vmatprep.mubr.f32.mxu0 %v654
    %1160 = vmatmul.mubr.f32.gmra.mrb[0].mxu0 %v653
    %v1161 = vpop.f32.mrb[0].mxu0
    %v1162 = vadd.f32 %v937, %v1161
    %v1163 = vpop.f32.mrb[0].mxu0
    %1164 = vmatprep.mubr.f32.mxu0 %v658
    %1165 = vmatmul.mubr.f32.gmra.mrb[0].mxu0 %v657
    %v1166 = vpop.f32.mrb[0].mxu0
    %v1167 = vadd.f32 %v942, %v1166
    %v1168 = vpop.f32.mrb[0].mxu0
    %1169 = vmatprep.mubr.f32.mxu0 %v662
    %1170 = vmatmul.mubr.f32.gmra.mrb[0].mxu0 %v661
    %v1171 = vpop.f32.mrb[0].mxu0
    %v1172 = vadd.f32 %v947, %v1171
    %v1173 = vpop.f32.mrb[0].mxu0
    %1174 = vmatprep.mubr.f32.mxu0 %v666
    %1175 = vmatmul.mubr.f32.gmra.mrb[0].mxu0 %v665
    %v1176 = vpop.f32.mrb[0].mxu0
    %v1177 = vadd.f32 %v952, %v1176
    %v1178 = vpop.f32.mrb[0].mxu0
    %1179 = vmatprep.mubr.f32.mxu0 %v670
    %1180 = vmatmul.mubr.f32.gmra.mrb[0].mxu0 %v669
    %v1181 = vpop.f32.mrb[0].mxu0
    %v1182 = vadd.f32 %v957, %v1181
    %v1183 = vpop.f32.mrb[0].mxu0
    %1184 = vdwg.mxu0
    %1185 = vst [vmem:[#allocation6] sm:$0xff] %v1027
    %1186 = vst [vmem:[#allocation6 + $0x8] sm:$0xff] %v1032
    %1187 = vst [vmem:[#allocation6 + $0x10] sm:$0xff] %v1037
    %1188 = vst [vmem:[#allocation6 + $0x18] sm:$0xff] %v1042
    %1189 = vst [vmem:[#allocation6 + $0x20] sm:$0xff] %v1047
    %1190 = vst [vmem:[#allocation6 + $0x28] sm:$0xff] %v1052
    %1191 = vst [vmem:[#allocation6 + $0x30] sm:$0xff] %v1057
    %1192 = vst [vmem:[#allocation6 + $0x38] sm:$0xff] %v1062
    %1193 = vst [vmem:[#allocation6 + $0x40] sm:$0xff] %v1067
    %1194 = vst [vmem:[#allocation6 + $0x48] sm:$0xff] %v1072
    %1195 = vst [vmem:[#allocation6 + $0x50] sm:$0xff] %v1077
    %1196 = vst [vmem:[#allocation6 + $0x58] sm:$0xff] %v1082
    %1197 = vst [vmem:[#allocation6 + $0x60] sm:$0xff] %v1087
    %1198 = vst [vmem:[#allocation6 + $0x68] sm:$0xff] %v1092
    %1199 = vst [vmem:[#allocation6 + $0x70] sm:$0xff] %v1097
    %1200 = vst [vmem:[#allocation6 + $0x78] sm:$0xff] %v1102
    %1201 = vst [vmem:[#allocation6 + $0x80] sm:$0xff] %v1107
    %1202 = vst [vmem:[#allocation6 + $0x88] sm:$0xff] %v1112
    %1203 = vst [vmem:[#allocation6 + $0x90] sm:$0xff] %v1117
    %1204 = vst [vmem:[#allocation6 + $0x98] sm:$0xff] %v1122
    %1205 = vst [vmem:[#allocation6 + $0xa0] sm:$0xff] %v1127
    %1206 = vst [vmem:[#allocation6 + $0xa8] sm:$0xff] %v1132
    %1207 = vst [vmem:[#allocation6 + $0xb0] sm:$0xff] %v1137
    %1208 = vst [vmem:[#allocation6 + $0xb8] sm:$0xff] %v1142
    %1209 = vst [vmem:[#allocation6 + $0xc0] sm:$0xff] %v1147
    %1210 = vst [vmem:[#allocation6 + $0xc8] sm:$0xff] %v1152
    %1211 = vst [vmem:[#allocation6 + $0xd0] sm:$0xff] %v1157
    %1212 = vst [vmem:[#allocation6 + $0xd8] sm:$0xff] %v1162
    %1213 = vst [vmem:[#allocation6 + $0xe0] sm:$0xff] %v1167
    %1214 = vst [vmem:[#allocation6 + $0xe8] sm:$0xff] %v1172
    %1215 = vst [vmem:[#allocation6 + $0xf0] sm:$0xff] %v1177
    %1216 = vst [vmem:[#allocation6 + $0xf8] sm:$0xff] %v1182
    // Predicated region
    $region14: #{tpu_custom_call.1} parent=1 // pred_check
      _
    $region15: #{tpu_custom_call.1} parent=1 // pred_check_branch
      %1218 = sbr.rel (0) target = $region17
    $region16: #{tpu_custom_call.1} parent=1 // pred_region
      %s1220 = ssub.s32 4096, 4096
      %1221 = vsyncadd [#allocation5], %s1220
      %s1222 = sshll.u32 [#allocation6], 4
      %s1223 = int_to_ptr.vmem [resolvable:$true] %s1222
      %1228 = dma.vmem_to_hbm [thread:$0]  %s1223, 4096, %s2, [#allocation5], 128, 128, 8
    $region17: #{tpu_custom_call.1} parent=1 // pred_fallthru
      _
    // Predicated region
    $region18: #{tpu_custom_call.1} parent=1 // pred_check
      _
    $region19: #{tpu_custom_call.1} parent=1 // pred_check_branch
      %1230 = sbr.rel (0) target = $region21
    $region20: #{tpu_custom_call.1} parent=1 // pred_region
      %1231 = dma.done [#allocation5], 4096
    $region21: #{tpu_custom_call.1} parent=1 // pred_fallthru
      _
    %1232 = vsyncpa [#allocation4], 1
    %1233 = vsyncpa [#allocation5], 1

</llo_original>
